<compile_context>
chip_gen: v7x
topology: tpu7x:2x2x1
jax: 0.10.0
libtpu: 0.0.40
codegen_flags: <defaults>
</compile_context>

<pallas_src>
import jax
import jax.numpy as jnp
from jax.experimental import pallas as pl
from jax.experimental.pallas import tpu as pltpu

LOG_STD_MIN = -20.0
LOG_STD_MAX = 2.0


def _round_up(x, m):
    return ((x + m - 1) // m) * m


def _sac_policy_kernel(x_ref, w1_ref, b1_ref, w2_ref, b2_ref, w3_ref, b3_ref,
                       mean_ref, log_std_ref, det_ref):
    """One batch tile: 3 MXU matmuls (head fused) + f32 bias/relu/clip/tanh."""
    cd = w1_ref.dtype                      # MXU operand dtype (bf16 or f32)
    ac = mean_ref.shape[-1]

    x = x_ref[...].astype(cd)
    h1 = jnp.dot(x, w1_ref[...], preferred_element_type=jnp.float32) + b1_ref[...]
    h1 = jnp.maximum(h1, 0.0).astype(cd)

    h2 = jnp.dot(h1, w2_ref[...], preferred_element_type=jnp.float32) + b2_ref[...]
    h2 = jnp.maximum(h2, 0.0).astype(cd)

    # Fused policy head: (mean | log_std) in a single MXU matmul, f32 accumulate.
    head = jnp.dot(h2, w3_ref[...], preferred_element_type=jnp.float32) + b3_ref[...]
    mean = head[:, :ac]
    log_std = jnp.clip(head[:, ac:], LOG_STD_MIN, LOG_STD_MAX)

    mean_ref[...] = mean.astype(mean_ref.dtype)
    log_std_ref[...] = log_std.astype(log_std_ref.dtype)
    det_ref[...] = jnp.tanh(mean).astype(det_ref.dtype)


def prepare_params(params, matmul_dtype=jnp.bfloat16):
    """Cast policy weights to the MXU operand dtype ONCE (per policy update).

    bf16 operands are native on all MXU generations and halve weight DMA/VMEM;
    biases stay f32 so bias add / relu / clip / tanh run in f32 everywhere
    (v5e has no bf16 VPU/EUP).  Doing this here hoists the per-call casting
    the previous wrapper paid on every forward.
    """
    out = dict(params)
    for k in ("w1", "w2", "w3"):
        out[k] = jnp.asarray(params[k], matmul_dtype)
    for k in ("b1", "b2", "b3"):
        out[k] = jnp.asarray(params[k], jnp.float32)
    return out


def sac_forward(obs, params, *, tile_b=1024, vmem_budget_bytes=32 * 1024 * 1024):
    """SAC policy-net forward pass as a single batch-tiled Pallas kernel.

    Args:
      obs:    f32[B, obs_dim]
      params: dict with w1[obs_dim,H], b1[1,H], w2[H,H], b2[1,H],
              w3[H,2*ac_dim], b3[1,2*ac_dim].  Weights may be f32 (exact) or
              bf16 (fast MXU path, see prepare_params); the matmul operand
              dtype is taken from w1.dtype.
      tile_b: max batch rows per grid step (large tiles amortise ~0.35us/step).
      vmem_budget_bytes: per-call VMEM budget; tile_b is shrunk to fit and the
        Mosaic scoped-VMEM limit is set to this value (32 MiB fits every
        generation, including v7x's 64 MiB physical VMEM).

    Returns:
      (mean[B,ac_dim], log_std[B,ac_dim], deterministic_acs[B,ac_dim]) in f32.
    """
    B, obs_dim = obs.shape
    H = params["w1"].shape[1]
    ac_dim = params["w3"].shape[1] // 2
    cd = params["w1"].dtype
    cd_bytes = jnp.dtype(cd).itemsize

    # ---- batch tile selection ------------------------------------------------
    b8 = _round_up(B, 8)                       # sublane-aligned batch
    tb = min(_round_up(tile_b, 8), b8)
    # v7x megacore: for batches worth splitting, keep >= 2 grid steps so the
    # "parallel" axis can shard across both TensorCores.
    if b8 >= 256 and tb >= b8:
        tb = _round_up(pl.cdiv(b8, 2), 8)

    def vmem_estimate(t):
        weights = (obs_dim * H + H * H + H * 2 * ac_dim) * cd_bytes * 2  # 2-buffered
        biases = (2 * H + 2 * ac_dim) * 4 * 2
        tile_in = t * obs_dim * obs.dtype.itemsize * 2
        tile_out = t * 3 * ac_dim * 4 * 2
        acts = t * (2 * H + 4 * ac_dim) * 4                              # f32 temps
        return weights + biases + tile_in + tile_out + acts

    while tb > 8 and vmem_estimate(tb) > vmem_budget_bytes:
        tb = _round_up(tb // 2, 8)

    b_p = _round_up(B, tb)
    grid = (b_p // tb,)

    # Pad only the batch axis, and only when B % tb != 0; feature dims are
    # DMA'd at their natural (unpadded) widths.
    x = obs
    if b_p != B:
        x = jnp.pad(obs, ((0, b_p - B), (0, 0)))

    def resident(shape):
        # Constant index_map: fetched once, stays VMEM-resident across the grid.
        # (For very large H these could additionally be single-buffered via
        #  pipeline_mode=pl.Buffered(1); at these sizes the budget clamp above
        #  already keeps us well inside VMEM on every generation.)
        return pl.BlockSpec(shape, lambda i: (0, 0))

    out_sds = jax.ShapeDtypeStruct((b_p, ac_dim), jnp.float32)
    out_spec = pl.BlockSpec((tb, ac_dim), lambda i: (i, 0))

    mean, log_std, det = pl.pallas_call(
        _sac_policy_kernel,
        out_shape=(out_sds, out_sds, out_sds),
        grid=grid,
        in_specs=[
            pl.BlockSpec((tb, obs_dim), lambda i: (i, 0)),   # obs tile (pipelined)
            resident((obs_dim, H)),                          # w1
            resident((1, H)),                                # b1
            resident((H, H)),                                # w2
            resident((1, H)),                                # b2
            resident((H, 2 * ac_dim)),                       # w3 (mean | log_std fused)
            resident((1, 2 * ac_dim)),                       # b3
        ],
        out_specs=(out_spec, out_spec, out_spec),
        compiler_params=pltpu.CompilerParams(
            dimension_semantics=("parallel",),
            vmem_limit_bytes=vmem_budget_bytes),
    )(x, params["w1"], params["b1"], params["w2"], params["b2"],
      params["w3"], params["b3"])

    if b_p != B:
        mean, log_std, det = mean[:B], log_std[:B], det[:B]
    return mean, log_std, det


def init_params(key, obs_dim, hidden, ac_dim):
    """Deterministic synthetic init (matches the shapes an SAC MLP policy implies)."""
    k1, k2, k3 = jax.random.split(key, 3)

    def linear(k, fan_in, fan_out):
        bound = 1.0 / jnp.sqrt(fan_in)
        w = jax.random.uniform(k, (fan_in, fan_out), jnp.float32, -bound, bound)
        b = jnp.zeros((1, fan_out), jnp.float32)
        return w, b

    w1, b1 = linear(k1, obs_dim, hidden)
    w2, b2 = linear(k2, hidden, hidden)
    w3, b3 = linear(k3, hidden, 2 * ac_dim)
    return {"w1": w1, "b1": b1, "w2": w2, "b2": b2, "w3": w3, "b3": b3}


def reference_forward(obs, params, ac_dim):
    h1 = jnp.maximum(obs @ params["w1"] + params["b1"], 0.0)
    h2 = jnp.maximum(h1 @ params["w2"] + params["b2"], 0.0)
    out = h2 @ params["w3"] + params["b3"]
    mean = out[:, :ac_dim]
    log_std = jnp.clip(out[:, ac_dim:], LOG_STD_MIN, LOG_STD_MAX)
    return mean, log_std, jnp.tanh(mean)


if __name__ == "__main__":
    OBS_DIM, HIDDEN, AC_DIM = 16, 32, 4

    key = jax.random.PRNGKey(0)
    k_obs, k_obs2, k_obs3, k_params = jax.random.split(key, 4)
    params = init_params(k_params, OBS_DIM, HIDDEN, AC_DIM)   # f32 (exact path)
    params_bf16 = prepare_params(params)                       # bf16 fast path, cast once

    # Small batch, single grid step, f32-exact matmuls.
    obs = jax.random.normal(k_obs, (8, OBS_DIM), jnp.float32)
    mean, log_std, det = sac_forward(obs, params)
    jax.block_until_ready((mean, log_std, det))
    r_mean, r_log_std, r_det = reference_forward(obs, params, AC_DIM)
    assert mean.shape == (8, AC_DIM)
    assert jnp.allclose(mean, r_mean, atol=1e-5)
    assert jnp.allclose(log_std, r_log_std, atol=1e-5)
    assert jnp.allclose(det, r_det, atol=1e-5)

    # Larger batch with the default tile_b: the tile is capped so the grid has
    # >= 2 steps (v7x megacore sharding) while staying f32-exact.
    obs2 = jax.random.normal(k_obs2, (256, OBS_DIM), jnp.float32)
    mean2, log_std2, det2 = sac_forward(obs2, params)
    jax.block_until_ready((mean2, log_std2, det2))
    r_mean2, r_log_std2, r_det2 = reference_forward(obs2, params, AC_DIM)
    assert jnp.allclose(mean2, r_mean2, atol=1e-5)
    assert jnp.allclose(log_std2, r_log_std2, atol=1e-5)
    assert jnp.allclose(det2, r_det2, atol=1e-5)

    # Ragged batch + bf16 matmul operands (recommended production path):
    # exercises batch padding, a multi-step pipelined grid and narrow outputs.
    obs3 = jax.random.normal(k_obs3, (100, OBS_DIM), jnp.float32)
    mean3, log_std3, det3 = sac_forward(obs3, params_bf16, tile_b=64)
    jax.block_until_ready((mean3, log_std3, det3))
    r_mean3, r_log_std3, r_det3 = reference_forward(obs3, params, AC_DIM)
    assert mean3.shape == (100, AC_DIM)
    assert jnp.allclose(mean3, r_mean3, atol=5e-2, rtol=5e-2)
    assert jnp.allclose(log_std3, r_log_std3, atol=5e-2, rtol=5e-2)
    assert jnp.allclose(det3, r_det3, atol=5e-2, rtol=5e-2)

    print("KERNEL_OK")
</pallas_src>

<mosaic_0001>
module attributes {stable_mosaic.version = 11 : i64} {
  func.func @_sac_policy_kernel(%arg0: i32, %arg1: memref<8x16xf32, #tpu.memory_space<vmem>>, %arg2: memref<16x32xf32, #tpu.memory_space<vmem>>, %arg3: memref<1x32xf32, #tpu.memory_space<vmem>>, %arg4: memref<32x32xf32, #tpu.memory_space<vmem>>, %arg5: memref<1x32xf32, #tpu.memory_space<vmem>>, %arg6: memref<32x8xf32, #tpu.memory_space<vmem>>, %arg7: memref<1x8xf32, #tpu.memory_space<vmem>>, %arg8: memref<8x4xf32, #tpu.memory_space<vmem>>, %arg9: memref<8x4xf32, #tpu.memory_space<vmem>>, %arg10: memref<8x4xf32, #tpu.memory_space<vmem>>) attributes {dimension_semantics = [#tpu.dimension_semantics<parallel>], iteration_bounds = array<i64: 1>, scalar_prefetch = 0 : i64, scratch_operands = 0 : i64, tpu.core_type = #tpu.core_type<tc>, window_params = [{transform_indices = @transform_0, window_bounds = array<i64: 8, 16>}, {pipeline_mode = #tpu.pipeline_mode<synchronous>, transform_indices = @transform_1, window_bounds = array<i64: 16, 32>}, {pipeline_mode = #tpu.pipeline_mode<synchronous>, transform_indices = @transform_2, window_bounds = array<i64: 1, 32>}, {pipeline_mode = #tpu.pipeline_mode<synchronous>, transform_indices = @transform_3, window_bounds = array<i64: 32, 32>}, {pipeline_mode = #tpu.pipeline_mode<synchronous>, transform_indices = @transform_4, window_bounds = array<i64: 1, 32>}, {pipeline_mode = #tpu.pipeline_mode<synchronous>, transform_indices = @transform_5, window_bounds = array<i64: 32, 8>}, {pipeline_mode = #tpu.pipeline_mode<synchronous>, transform_indices = @transform_6, window_bounds = array<i64: 1, 8>}, {transform_indices = @transform_7, window_bounds = array<i64: 8, 4>}, {transform_indices = @transform_8, window_bounds = array<i64: 8, 4>}, {transform_indices = @transform_9, window_bounds = array<i64: 8, 4>}]} {
    %c0 = arith.constant 0 : index
    %c0_0 = arith.constant 0 : index
    %0 = vector.load %arg1[%c0, %c0_0] : memref<8x16xf32, #tpu.memory_space<vmem>>, vector<8x16xf32>
    %c0_1 = arith.constant 0 : index
    %c0_2 = arith.constant 0 : index
    %1 = vector.load %arg2[%c0_1, %c0_2] : memref<16x32xf32, #tpu.memory_space<vmem>>, vector<16x32xf32>
    %cst = arith.constant dense<0.000000e+00> : vector<8x32xf32>
    %2 = tpu.matmul %0, %1, %cst {dimension_numbers = #tpu.dot_dimension_numbers<[1], [0], [0], [1], [0, 0, 1, 1], [], []>} : vector<8x16xf32>, vector<16x32xf32>, vector<8x32xf32> -> vector<8x32xf32>
    %c0_3 = arith.constant 0 : index
    %c0_4 = arith.constant 0 : index
    %3 = vector.load %arg3[%c0_3, %c0_4] : memref<1x32xf32, #tpu.memory_space<vmem>>, vector<1x32xf32>
    %4 = vector.broadcast %3 : vector<1x32xf32> to vector<8x32xf32>
    %5 = arith.addf %2, %4 : vector<8x32xf32>
    %cst_5 = arith.constant 0.000000e+00 : f32
    %6 = vector.broadcast %cst_5 : f32 to vector<8x32xf32>
    %7 = arith.maximumf %5, %6 : vector<8x32xf32>
    %c0_6 = arith.constant 0 : index
    %c0_7 = arith.constant 0 : index
    %8 = vector.load %arg4[%c0_6, %c0_7] : memref<32x32xf32, #tpu.memory_space<vmem>>, vector<32x32xf32>
    %cst_8 = arith.constant dense<0.000000e+00> : vector<8x32xf32>
    %9 = tpu.matmul %7, %8, %cst_8 {dimension_numbers = #tpu.dot_dimension_numbers<[1], [0], [0], [1], [0, 0, 1, 1], [], []>} : vector<8x32xf32>, vector<32x32xf32>, vector<8x32xf32> -> vector<8x32xf32>
    %c0_9 = arith.constant 0 : index
    %c0_10 = arith.constant 0 : index
    %10 = vector.load %arg5[%c0_9, %c0_10] : memref<1x32xf32, #tpu.memory_space<vmem>>, vector<1x32xf32>
    %11 = vector.broadcast %10 : vector<1x32xf32> to vector<8x32xf32>
    %12 = arith.addf %9, %11 : vector<8x32xf32>
    %cst_11 = arith.constant 0.000000e+00 : f32
    %13 = vector.broadcast %cst_11 : f32 to vector<8x32xf32>
    %14 = arith.maximumf %12, %13 : vector<8x32xf32>
    %c0_12 = arith.constant 0 : index
    %c0_13 = arith.constant 0 : index
    %15 = vector.load %arg6[%c0_12, %c0_13] : memref<32x8xf32, #tpu.memory_space<vmem>>, vector<32x8xf32>
    %cst_14 = arith.constant dense<0.000000e+00> : vector<8x8xf32>
    %16 = tpu.matmul %14, %15, %cst_14 {dimension_numbers = #tpu.dot_dimension_numbers<[1], [0], [0], [1], [0, 0, 1, 1], [], []>} : vector<8x32xf32>, vector<32x8xf32>, vector<8x8xf32> -> vector<8x8xf32>
    %c0_15 = arith.constant 0 : index
    %c0_16 = arith.constant 0 : index
    %17 = vector.load %arg7[%c0_15, %c0_16] : memref<1x8xf32, #tpu.memory_space<vmem>>, vector<1x8xf32>
    %18 = vector.broadcast %17 : vector<1x8xf32> to vector<8x8xf32>
    %19 = arith.addf %16, %18 : vector<8x8xf32>
    %20 = vector.extract_strided_slice %19 {offsets = [0, 0], sizes = [8, 4], strides = [1, 1]} : vector<8x8xf32> to vector<8x4xf32>
    %21 = vector.extract_strided_slice %19 {offsets = [0, 4], sizes = [8, 4], strides = [1, 1]} : vector<8x8xf32> to vector<8x4xf32>
    %cst_17 = arith.constant -2.000000e+01 : f32
    %cst_18 = arith.constant 2.000000e+00 : f32
    %22 = vector.broadcast %cst_17 : f32 to vector<8x4xf32>
    %23 = arith.maximumf %22, %21 : vector<8x4xf32>
    %24 = vector.broadcast %cst_18 : f32 to vector<8x4xf32>
    %25 = arith.minimumf %24, %23 : vector<8x4xf32>
    %c0_19 = arith.constant 0 : index
    %c0_20 = arith.constant 0 : index
    %26 = vector.load %arg8[%c0_19, %c0_20] : memref<8x4xf32, #tpu.memory_space<vmem>>, vector<8x4xf32>
    tpu.vector_store %arg8[%c0_19, %c0_20], %20 {strides = array<i32>} : memref<8x4xf32, #tpu.memory_space<vmem>>, vector<8x4xf32>,
    %c0_21 = arith.constant 0 : index
    %c0_22 = arith.constant 0 : index
    %27 = vector.load %arg9[%c0_21, %c0_22] : memref<8x4xf32, #tpu.memory_space<vmem>>, vector<8x4xf32>
    tpu.vector_store %arg9[%c0_21, %c0_22], %25 {strides = array<i32>} : memref<8x4xf32, #tpu.memory_space<vmem>>, vector<8x4xf32>,
    %28 = math.tanh %20 : vector<8x4xf32>
    %c0_23 = arith.constant 0 : index
    %c0_24 = arith.constant 0 : index
    %29 = vector.load %arg10[%c0_23, %c0_24] : memref<8x4xf32, #tpu.memory_space<vmem>>, vector<8x4xf32>
    tpu.vector_store %arg10[%c0_23, %c0_24], %28 {strides = array<i32>} : memref<8x4xf32, #tpu.memory_space<vmem>>, vector<8x4xf32>,
    return
  }
  func.func @transform_0(%arg0: i32) -> (i32, i32) {
    %c0_i32 = arith.constant 0 : i32
    %c0_i32_0 = arith.constant 0 : i32
    return %arg0, %c0_i32 : i32, i32
  }
  func.func @transform_1(%arg0: i32) -> (i32, i32) {
    %c0_i32 = arith.constant 0 : i32
    %c0_i32_0 = arith.constant 0 : i32
    %c0_i32_1 = arith.constant 0 : i32
    return %c0_i32, %c0_i32_0 : i32, i32
  }
  func.func @transform_2(%arg0: i32) -> (i32, i32) {
    %c0_i32 = arith.constant 0 : i32
    %c0_i32_0 = arith.constant 0 : i32
    %c0_i32_1 = arith.constant 0 : i32
    return %c0_i32, %c0_i32_0 : i32, i32
  }
  func.func @transform_3(%arg0: i32) -> (i32, i32) {
    %c0_i32 = arith.constant 0 : i32
    %c0_i32_0 = arith.constant 0 : i32
    %c0_i32_1 = arith.constant 0 : i32
    return %c0_i32, %c0_i32_0 : i32, i32
  }
  func.func @transform_4(%arg0: i32) -> (i32, i32) {
    %c0_i32 = arith.constant 0 : i32
    %c0_i32_0 = arith.constant 0 : i32
    %c0_i32_1 = arith.constant 0 : i32
    return %c0_i32, %c0_i32_0 : i32, i32
  }
  func.func @transform_5(%arg0: i32) -> (i32, i32) {
    %c0_i32 = arith.constant 0 : i32
    %c0_i32_0 = arith.constant 0 : i32
    %c0_i32_1 = arith.constant 0 : i32
    return %c0_i32, %c0_i32_0 : i32, i32
  }
  func.func @transform_6(%arg0: i32) -> (i32, i32) {
    %c0_i32 = arith.constant 0 : i32
    %c0_i32_0 = arith.constant 0 : i32
    %c0_i32_1 = arith.constant 0 : i32
    return %c0_i32, %c0_i32_0 : i32, i32
  }
  func.func @transform_7(%arg0: i32) -> (i32, i32) {
    %c0_i32 = arith.constant 0 : i32
    %c0_i32_0 = arith.constant 0 : i32
    return %arg0, %c0_i32 : i32, i32
  }
  func.func @transform_8(%arg0: i32) -> (i32, i32) {
    %c0_i32 = arith.constant 0 : i32
    %c0_i32_0 = arith.constant 0 : i32
    return %arg0, %c0_i32 : i32, i32
  }
  func.func @transform_9(%arg0: i32) -> (i32, i32) {
    %c0_i32 = arith.constant 0 : i32
    %c0_i32_0 = arith.constant 0 : i32
    return %arg0, %c0_i32 : i32, i32
  }
}

</mosaic_0001>

<llo_original>
// kernel: tpu_custom_call.1
$region0: #{tpu_custom_call.1}
  #allocation0 [shape = 'u32[]', space=smem, size = 0x4, offset = 0x4, fixed_abs, tag = 'smem constant byte address 0x4 - core index']
  #allocation1 [shape = 'u32[144,128]{1,0:T(1,128)}', space=vmem, size = 0x12000, scoped, tag = 'internal scratch']
  %s0 = inlined_call_operand.hbm [shape: f32[8,16], index: 0, kind: input, shape index: {}]
  %s1 = inlined_call_operand.vmem [shape: f32[16,32], index: 1, kind: input, shape index: {}]
  %s2 = inlined_call_operand.vmem [shape: f32[1,32], index: 2, kind: input, shape index: {}]
  %s3 = inlined_call_operand.vmem [shape: f32[32,32], index: 3, kind: input, shape index: {}]
  %s4 = inlined_call_operand.vmem [shape: f32[1,32], index: 4, kind: input, shape index: {}]
  %s5 = inlined_call_operand.vmem [shape: f32[32,8], index: 5, kind: input, shape index: {}]
  %s6 = inlined_call_operand.vmem [shape: f32[1,8], index: 6, kind: input, shape index: {}]
  %s7 = inlined_call_operand.vmem [shape: f32[8,4], index: 7, kind: output, shape index: {0}]
  %s8 = inlined_call_operand.vmem [shape: f32[8,4], index: 8, kind: output, shape index: {1}]
  %s9 = inlined_call_operand.vmem [shape: f32[8,4], index: 9, kind: output, shape index: {2}]
  %10 = xla_tuple %s7, %s8, %s9
  %s11 = sld [smem:[#allocation0]]
  $region58: #{tpu_custom_call.1} parent=0
    _
  %s13 = ssub.s32 1, %s11
  %s14 = scalar_select 0, %s13, %s11
  $region1: #{tpu_custom_call.1} parent=0
    #allocation2 [shape = 'u8[4096]{0}', space=vmem, size = 0x1000, scoped, tag = 'input window, operand 0, single buffered']
    #allocation3 [shape = 's32[1]{0}', space=sflag, size = 0x4, scoped, tag = 'scoped memory for tpu_custom_call.1']
    %15 = vsyncpa [#allocation3], 0
    // Predicated region
    $region2: #{tpu_custom_call.1} parent=1 // pred_check
      _
    $region3: #{tpu_custom_call.1} parent=1 // pred_check_branch
      %17 = sbr.rel (0) target = $region5
    $region4: #{tpu_custom_call.1} parent=1 // pred_region
      %s19 = ssub.s32 128, 128
      %20 = vsyncadd [#allocation3], %s19
      %s22 = sshll.u32 [#allocation2], 4
      %s23 = int_to_ptr.vmem [resolvable:$true] %s22
      %25 = dma.hbm_to_vmem [thread:$0]  %s0, 128, %s23, [#allocation3]
    $region5: #{tpu_custom_call.1} parent=1 // pred_fallthru
      _
    // Predicated region
    $region6: #{tpu_custom_call.1} parent=1 // pred_check
      _
    $region7: #{tpu_custom_call.1} parent=1 // pred_check_branch
      %27 = sbr.rel (0) target = $region9
    $region8: #{tpu_custom_call.1} parent=1 // pred_region
      _
    $region9: #{tpu_custom_call.1} parent=1 // pred_fallthru
      _
    // Predicated region
    $region10: #{tpu_custom_call.1} parent=1 // pred_check
      _
    $region11: #{tpu_custom_call.1} parent=1 // pred_check_branch
      %29 = sbr.rel (0) target = $region13
    $region12: #{tpu_custom_call.1} parent=1 // pred_region
      _
    $region13: #{tpu_custom_call.1} parent=1 // pred_fallthru
      _
    // Predicated region
    $region14: #{tpu_custom_call.1} parent=1 // pred_check
      _
    $region15: #{tpu_custom_call.1} parent=1 // pred_check_branch
      %31 = sbr.rel (0) target = $region17
    $region16: #{tpu_custom_call.1} parent=1 // pred_region
      _
    $region17: #{tpu_custom_call.1} parent=1 // pred_fallthru
      _
    // Predicated region
    $region18: #{tpu_custom_call.1} parent=1 // pred_check
      _
    $region19: #{tpu_custom_call.1} parent=1 // pred_check_branch
      %33 = sbr.rel (0) target = $region21
    $region20: #{tpu_custom_call.1} parent=1 // pred_region
      _
    $region21: #{tpu_custom_call.1} parent=1 // pred_fallthru
      _
    // Predicated region
    $region22: #{tpu_custom_call.1} parent=1 // pred_check
      _
    $region23: #{tpu_custom_call.1} parent=1 // pred_check_branch
      %35 = sbr.rel (0) target = $region25
    $region24: #{tpu_custom_call.1} parent=1 // pred_region
      _
    $region25: #{tpu_custom_call.1} parent=1 // pred_fallthru
      _
    // Predicated region
    $region26: #{tpu_custom_call.1} parent=1 // pred_check
      _
    $region27: #{tpu_custom_call.1} parent=1 // pred_check_branch
      %37 = sbr.rel (0) target = $region29
    $region28: #{tpu_custom_call.1} parent=1 // pred_region
      _
    $region29: #{tpu_custom_call.1} parent=1 // pred_fallthru
      _
    // Predicated region
    $region30: #{tpu_custom_call.1} parent=1 // pred_check
      _
    $region31: #{tpu_custom_call.1} parent=1 // pred_check_branch
      %39 = sbr.rel (0) target = $region33
    $region32: #{tpu_custom_call.1} parent=1 // pred_region
      %40 = dma.done [#allocation3], 128
    $region33: #{tpu_custom_call.1} parent=1 // pred_fallthru
      _
    %v41 = vld [vmem:[#allocation2] sm:$0xff]
    %v42 = vld [vmem:[%s1] sm:$0xff]
    %v43 = vld [vmem:[%s1 + $0x8] sm:$0xff]
    %v44 = vld [vmem:[%s2] sm:$0x1]
    %v46 = vlaneseq
    %v47 = vshrl.u32 %v46, 7
    %v48 = vsub.s32 0, %v47
    %v49 = vrot.slane %v44, %v48
    %vm51 = vcmask 130048
    %v53 = vsel %vm51, %v41, 0
    %55 = vmatprep.subr.mxu0 0.0
    %56 = vmatpush1.msra.mxu0 %v42
    %57 = vmatprep.subr.mxu0 0.0
    %58 = vmatpush1.msra.mxu0 %v43
    %59 = vmatprep.subr.mxu0 0.0
    %60 = vmatpush1.msra.mxu0 0.0
    %61 = vmatprep.subr.mxu0 0.0
    %62 = vmatpush1.msra.mxu0 0.0
    %63 = vmatprep.subr.mxu0 0.0
    %64 = vmatpush1.msra.mxu0 0.0
    %65 = vmatprep.subr.mxu0 0.0
    %66 = vmatpush1.msra.mxu0 0.0
    %67 = vmatprep.subr.mxu0 0.0
    %68 = vmatpush1.msra.mxu0 0.0
    %69 = vmatprep.subr.mxu0 0.0
    %70 = vmatpush1.msra.mxu0 0.0
    %71 = vmatprep.subr.mxu0 0.0
    %72 = vmatpush1.msra.mxu0 0.0
    %73 = vmatprep.subr.mxu0 0.0
    %74 = vmatpush1.msra.mxu0 0.0
    %75 = vmatprep.subr.mxu0 0.0
    %76 = vmatpush1.msra.mxu0 0.0
    %77 = vmatprep.subr.mxu0 0.0
    %78 = vmatpush1.msra.mxu0 0.0
    %79 = vmatprep.subr.mxu0 0.0
    %80 = vmatpush1.msra.mxu0 0.0
    %81 = vmatprep.subr.mxu0 0.0
    %82 = vmatpush1.msra.mxu0 0.0
    %83 = vmatprep.subr.mxu0 0.0
    %84 = vmatpush1.msra.mxu0 0.0
    %85 = vmatprep.subr.mxu0 0.0
    %86 = vmatpush1.msra.mxu0 0.0
    %87 = vmatprep.subr.mxu0 0.0
    %88 = vmatpush1.msra.mxu0 0.0
    %89 = vmatprep.subr.mxu0 0.0
    %90 = vmatpush1.msra.mxu0 0.0
    %91 = vmatprep.subr.mxu0 0.0
    %92 = vmatpush1.msra.mxu0 0.0
    %93 = vmatprep.subr.mxu0 0.0
    %94 = vmatpush1.msra.mxu0 0.0
    %95 = vmatprep.subr.mxu0 0.0
    %96 = vmatpush1.msra.mxu0 0.0
    %97 = vmatprep.subr.mxu0 0.0
    %98 = vmatpush1.msra.mxu0 0.0
    %99 = vmatprep.subr.mxu0 0.0
    %100 = vmatpush1.msra.mxu0 0.0
    %101 = vmatprep.subr.mxu0 0.0
    %102 = vmatpush1.msra.mxu0 0.0
    %103 = vmatprep.subr.mxu0 0.0
    %104 = vmatpush1.msra.mxu0 0.0
    %105 = vmatprep.subr.mxu0 0.0
    %106 = vmatpush1.msra.mxu0 0.0
    %107 = vmatprep.subr.mxu0 0.0
    %108 = vmatpush1.msra.mxu0 0.0
    %109 = vmatprep.subr.mxu0 0.0
    %110 = vmatpush1.msra.mxu0 0.0
    %111 = vmatprep.subr.mxu0 0.0
    %112 = vmatpush1.msra.mxu0 0.0
    %113 = vmatprep.subr.mxu0 0.0
    %114 = vmatpush1.msra.mxu0 0.0
    %115 = vmatprep.subr.mxu0 0.0
    %116 = vmatpush1.msra.mxu0 0.0
    %117 = vmatprep.subr.mxu0 0.0
    %118 = vmatpush1.msra.mxu0 0.0
    %119 = vmatprep.mubr.f32.mxu0 0.0
    %120 = vmatmul.mubr.f32.gmra.mrb[0].mxu0 %v53
    %v121 = vpop.f32.mrb[0].mxu0
    %v122 = vadd.f32 %v49, %v121
    %v123 = vpop.f32.mrb[0].mxu0
    %124 = vdwg.mxu0
    %v125 = vmax.f32 %v122, 0.0
    %v126 = vld [vmem:[%s3] sm:$0xff]
    %v127 = vld [vmem:[%s3 + $0x8] sm:$0xff]
    %v128 = vld [vmem:[%s3 + $0x10] sm:$0xff]
    %v129 = vld [vmem:[%s3 + $0x18] sm:$0xff]
    %v130 = vld [vmem:[%s4] sm:$0x1]
    %v132 = vlaneseq
    %v133 = vshrl.u32 %v132, 7
    %v134 = vsub.s32 0, %v133
    %v135 = vrot.slane %v130, %v134
    %vm137 = vcmask 261120
    %v139 = vsel %vm137, %v125, 0
    %141 = vmatprep.subr.mxu0 0.0
    %142 = vmatpush1.msra.mxu0 %v126
    %143 = vmatprep.subr.mxu0 0.0
    %144 = vmatpush1.msra.mxu0 %v127
    %145 = vmatprep.subr.mxu0 0.0
    %146 = vmatpush1.msra.mxu0 %v128
    %147 = vmatprep.subr.mxu0 0.0
    %148 = vmatpush1.msra.mxu0 %v129
    %149 = vmatprep.subr.mxu0 0.0
    %150 = vmatpush1.msra.mxu0 0.0
    %151 = vmatprep.subr.mxu0 0.0
    %152 = vmatpush1.msra.mxu0 0.0
    %153 = vmatprep.subr.mxu0 0.0
    %154 = vmatpush1.msra.mxu0 0.0
    %155 = vmatprep.subr.mxu0 0.0
    %156 = vmatpush1.msra.mxu0 0.0
    %157 = vmatprep.subr.mxu0 0.0
    %158 = vmatpush1.msra.mxu0 0.0
    %159 = vmatprep.subr.mxu0 0.0
    %160 = vmatpush1.msra.mxu0 0.0
    %161 = vmatprep.subr.mxu0 0.0
    %162 = vmatpush1.msra.mxu0 0.0
    %163 = vmatprep.subr.mxu0 0.0
    %164 = vmatpush1.msra.mxu0 0.0
    %165 = vmatprep.subr.mxu0 0.0
    %166 = vmatpush1.msra.mxu0 0.0
    %167 = vmatprep.subr.mxu0 0.0
    %168 = vmatpush1.msra.mxu0 0.0
    %169 = vmatprep.subr.mxu0 0.0
    %170 = vmatpush1.msra.mxu0 0.0
    %171 = vmatprep.subr.mxu0 0.0
    %172 = vmatpush1.msra.mxu0 0.0
    %173 = vmatprep.subr.mxu0 0.0
    %174 = vmatpush1.msra.mxu0 0.0
    %175 = vmatprep.subr.mxu0 0.0
    %176 = vmatpush1.msra.mxu0 0.0
    %177 = vmatprep.subr.mxu0 0.0
    %178 = vmatpush1.msra.mxu0 0.0
    %179 = vmatprep.subr.mxu0 0.0
    %180 = vmatpush1.msra.mxu0 0.0
    %181 = vmatprep.subr.mxu0 0.0
    %182 = vmatpush1.msra.mxu0 0.0
    %183 = vmatprep.subr.mxu0 0.0
    %184 = vmatpush1.msra.mxu0 0.0
    %185 = vmatprep.subr.mxu0 0.0
    %186 = vmatpush1.msra.mxu0 0.0
    %187 = vmatprep.subr.mxu0 0.0
    %188 = vmatpush1.msra.mxu0 0.0
    %189 = vmatprep.subr.mxu0 0.0
    %190 = vmatpush1.msra.mxu0 0.0
    %191 = vmatprep.subr.mxu0 0.0
    %192 = vmatpush1.msra.mxu0 0.0
    %193 = vmatprep.subr.mxu0 0.0
    %194 = vmatpush1.msra.mxu0 0.0
    %195 = vmatprep.subr.mxu0 0.0
    %196 = vmatpush1.msra.mxu0 0.0
    %197 = vmatprep.subr.mxu0 0.0
    %198 = vmatpush1.msra.mxu0 0.0
    %199 = vmatprep.subr.mxu0 0.0
    %200 = vmatpush1.msra.mxu0 0.0
    %201 = vmatprep.subr.mxu0 0.0
    %202 = vmatpush1.msra.mxu0 0.0
    %203 = vmatprep.subr.mxu0 0.0
    %204 = vmatpush1.msra.mxu0 0.0
    %205 = vmatprep.mubr.f32.mxu0 0.0
    %206 = vmatmul.mubr.f32.gmra.mrb[0].mxu0 %v139
    %v207 = vpop.f32.mrb[0].mxu0
    %v208 = vadd.f32 %v135, %v207
    %v209 = vpop.f32.mrb[0].mxu0
    %210 = vdwg.mxu0
    %v211 = vmax.f32 %v208, 0.0
    %v212 = vld [vmem:[%s5] sm:$0xff]
    %v213 = vld [vmem:[%s5 + $0x8] sm:$0xff]
    %v214 = vld [vmem:[%s5 + $0x10] sm:$0xff]
    %v215 = vld [vmem:[%s5 + $0x18] sm:$0xff]
    %v216 = vld [vmem:[%s6] sm:$0x1]
    %v218 = vlaneseq
    %v219 = vshrl.u32 %v218, 7
    %v220 = vsub.s32 0, %v219
    %v221 = vrot.slane %v216, %v220
    %v224 = vsel %vm137, %v211, 0
    %226 = vmatprep.subr.mxu0 0.0
    %227 = vmatpush1.msra.mxu0 %v212
    %228 = vmatprep.subr.mxu0 0.0
    %229 = vmatpush1.msra.mxu0 %v213
    %230 = vmatprep.subr.mxu0 0.0
    %231 = vmatpush1.msra.mxu0 %v214
    %232 = vmatprep.subr.mxu0 0.0
    %233 = vmatpush1.msra.mxu0 %v215
    %234 = vmatprep.subr.mxu0 0.0
    %235 = vmatpush1.msra.mxu0 0.0
    %236 = vmatprep.subr.mxu0 0.0
    %237 = vmatpush1.msra.mxu0 0.0
    %238 = vmatprep.subr.mxu0 0.0
    %239 = vmatpush1.msra.mxu0 0.0
    %240 = vmatprep.subr.mxu0 0.0
    %241 = vmatpush1.msra.mxu0 0.0
    %242 = vmatprep.subr.mxu0 0.0
    %243 = vmatpush1.msra.mxu0 0.0
    %244 = vmatprep.subr.mxu0 0.0
    %245 = vmatpush1.msra.mxu0 0.0
    %246 = vmatprep.subr.mxu0 0.0
    %247 = vmatpush1.msra.mxu0 0.0
    %248 = vmatprep.subr.mxu0 0.0
    %249 = vmatpush1.msra.mxu0 0.0
    %250 = vmatprep.subr.mxu0 0.0
    %251 = vmatpush1.msra.mxu0 0.0
    %252 = vmatprep.subr.mxu0 0.0
    %253 = vmatpush1.msra.mxu0 0.0
    %254 = vmatprep.subr.mxu0 0.0
    %255 = vmatpush1.msra.mxu0 0.0
    %256 = vmatprep.subr.mxu0 0.0
    %257 = vmatpush1.msra.mxu0 0.0
    %258 = vmatprep.subr.mxu0 0.0
    %259 = vmatpush1.msra.mxu0 0.0
    %260 = vmatprep.subr.mxu0 0.0
    %261 = vmatpush1.msra.mxu0 0.0
    %262 = vmatprep.subr.mxu0 0.0
    %263 = vmatpush1.msra.mxu0 0.0
    %264 = vmatprep.subr.mxu0 0.0
    %265 = vmatpush1.msra.mxu0 0.0
    %266 = vmatprep.subr.mxu0 0.0
    %267 = vmatpush1.msra.mxu0 0.0
    %268 = vmatprep.subr.mxu0 0.0
    %269 = vmatpush1.msra.mxu0 0.0
    %270 = vmatprep.subr.mxu0 0.0
    %271 = vmatpush1.msra.mxu0 0.0
    %272 = vmatprep.subr.mxu0 0.0
    %273 = vmatpush1.msra.mxu0 0.0
    %274 = vmatprep.subr.mxu0 0.0
    %275 = vmatpush1.msra.mxu0 0.0
    %276 = vmatprep.subr.mxu0 0.0
    %277 = vmatpush1.msra.mxu0 0.0
    %278 = vmatprep.subr.mxu0 0.0
    %279 = vmatpush1.msra.mxu0 0.0
    %280 = vmatprep.subr.mxu0 0.0
    %281 = vmatpush1.msra.mxu0 0.0
    %282 = vmatprep.subr.mxu0 0.0
    %283 = vmatpush1.msra.mxu0 0.0
    %284 = vmatprep.subr.mxu0 0.0
    %285 = vmatpush1.msra.mxu0 0.0
    %286 = vmatprep.subr.mxu0 0.0
    %287 = vmatpush1.msra.mxu0 0.0
    %288 = vmatprep.subr.mxu0 0.0
    %289 = vmatpush1.msra.mxu0 0.0
    %290 = vmatprep.mubr.f32.mxu0 0.0
    %291 = vmatmul.mubr.f32.gmra.mrb[0].mxu0 %v224
    %v292 = vpop.f32.mrb[0].mxu0
    %v293 = vadd.f32 %v221, %v292
    %v294 = vpop.f32.mrb[0].mxu0
    %295 = vdwg.mxu0
    %v296 = vmax.f32 %v293, -20.0
    %v297 = vmin.f32 %v296, 2.0
    %vm298 = vcmask 31744
    %299 = vst.msk [vmem:[%s7] sm:$0xff] %vm298, %v293
    %301 = vrot.lane.b32.xlu0 %v297, 124
    %v302 = vpop.permute.xlu0 %301
    %304 = vst.msk [vmem:[%s8] sm:$0xff] %vm298, %v302
    %v305 = vtanh.pop %v293
    %306 = vst.msk [vmem:[%s9] sm:$0xff] %vm298, %v305
    // Predicated region
    $region34: #{tpu_custom_call.1} parent=1 // pred_check
      _
    $region35: #{tpu_custom_call.1} parent=1 // pred_check_branch
      %308 = sbr.rel (0) target = $region37
    $region36: #{tpu_custom_call.1} parent=1 // pred_region
      _
    $region37: #{tpu_custom_call.1} parent=1 // pred_fallthru
      _
    // Predicated region
    $region38: #{tpu_custom_call.1} parent=1 // pred_check
      _
    $region39: #{tpu_custom_call.1} parent=1 // pred_check_branch
      %310 = sbr.rel (0) target = $region41
    $region40: #{tpu_custom_call.1} parent=1 // pred_region
      _
    $region41: #{tpu_custom_call.1} parent=1 // pred_fallthru
      _
    // Predicated region
    $region42: #{tpu_custom_call.1} parent=1 // pred_check
      _
    $region43: #{tpu_custom_call.1} parent=1 // pred_check_branch
      %312 = sbr.rel (0) target = $region45
    $region44: #{tpu_custom_call.1} parent=1 // pred_region
      _
    $region45: #{tpu_custom_call.1} parent=1 // pred_fallthru
      _
    // Predicated region
    $region46: #{tpu_custom_call.1} parent=1 // pred_check
      _
    $region47: #{tpu_custom_call.1} parent=1 // pred_check_branch
      %314 = sbr.rel (0) target = $region49
    $region48: #{tpu_custom_call.1} parent=1 // pred_region
      _
    $region49: #{tpu_custom_call.1} parent=1 // pred_fallthru
      _
    // Predicated region
    $region50: #{tpu_custom_call.1} parent=1 // pred_check
      _
    $region51: #{tpu_custom_call.1} parent=1 // pred_check_branch
      %316 = sbr.rel (0) target = $region53
    $region52: #{tpu_custom_call.1} parent=1 // pred_region
      _
    $region53: #{tpu_custom_call.1} parent=1 // pred_fallthru
      _
    // Predicated region
    $region54: #{tpu_custom_call.1} parent=1 // pred_check
      _
    $region55: #{tpu_custom_call.1} parent=1 // pred_check_branch
      %318 = sbr.rel (0) target = $region57
    $region56: #{tpu_custom_call.1} parent=1 // pred_region
      _
    $region57: #{tpu_custom_call.1} parent=1 // pred_fallthru
      _
    %319 = vsyncpa [#allocation3], 1

</llo_original>
